<compile_context>
chip_gen: v7x
topology: tpu7x:2x2x1
jax: 0.10.0
libtpu: 0.0.40
codegen_flags: <defaults>
</compile_context>

<pallas_src>
import functools

import jax
import jax.numpy as jnp
from jax.experimental import pallas as pl
from jax.experimental.pallas import tpu as pltpu


# ----------------------------------------------------------------------------
# Pallas kernel: fused patch-projection matmul + bias epilogue
# ----------------------------------------------------------------------------
def _proj_kernel(x_ref, w_ref, b_ref, o_ref):
    # bf16 x bf16 on the MXU, f32 accumulation; bias add in f32 on the VPU.
    acc = jnp.dot(x_ref[...], w_ref[...], preferred_element_type=jnp.float32)
    o_ref[...] = acc + b_ref[...]


def _round_up(x, m):
    return ((x + m - 1) // m) * m


def patch_proj_matmul(patches, w, b):
    """out = patches @ w + b; patches:(M,K) f32, w:(K,N) f32, b:(N,) f32 -> (M,N) f32."""
    M, K = patches.shape
    N = w.shape[1]

    # Adaptive M tile: multiple of 8, <=128, and >=2 grid steps whenever M allows it
    # (so the 'parallel' axis can be sharded across the two TensorCores on v7x).
    if M >= 256:
        tm = 128
    else:
        tm = max(8, _round_up(max(1, M // 2), 8))
    grid_m = pl.cdiv(M, tm)  # no jnp.pad of M; rows are independent, edge blocks are safe

    xb = patches.astype(jnp.bfloat16)
    wb = w.astype(jnp.bfloat16)
    bf = b.reshape(1, N).astype(jnp.float32)

    return pl.pallas_call(
        _proj_kernel,
        out_shape=jax.ShapeDtypeStruct((M, N), jnp.float32),
        grid=(grid_m,),
        in_specs=[
            pl.BlockSpec((tm, K), lambda i: (i, 0)),   # activation tile
            pl.BlockSpec((K, N), lambda i: (0, 0)),    # full weight, resident in VMEM
            pl.BlockSpec((1, N), lambda i: (0, 0)),    # bias
        ],
        out_specs=pl.BlockSpec((tm, N), lambda i: (i, 0)),  # lane-dense (N multiple of 128)
        compiler_params=pltpu.CompilerParams(
            dimension_semantics=("parallel",),
        ),
    )(xb, wb, bf)


# ----------------------------------------------------------------------------
# Parameter init (deterministic, synthetic; matmul-ready (K, N) weight layout)
# ----------------------------------------------------------------------------
def init_patch_embed_params(key, in_chans=3, embed_dim=128, patch_size=16):
    k_w, k_b = jax.random.split(key)
    fan_in = in_chans * patch_size * patch_size
    fan_out = embed_dim
    limit = (6.0 / (fan_in + fan_out)) ** 0.5  # xavier_uniform on the flattened weight
    # Stored as (K, N) = (C*p*p, embed_dim); K runs in (c, ki, kj) order, i.e. the
    # transpose of torch's proj.weight.reshape(embed_dim, -1).
    w = jax.random.uniform(k_w, (fan_in, embed_dim), jnp.float32, -limit, limit)
    b = 0.02 * jax.random.normal(k_b, (embed_dim,), dtype=jnp.float32)
    return {"proj_w": w, "proj_b": b}


# ----------------------------------------------------------------------------
# Forward pass (PatchEmbed.forward semantics)
# ----------------------------------------------------------------------------
def patch_embed_forward(params, x, *, patch_size=16, flatten=True):
    """Returns (tokens, pos) like the PyTorch module: tokens (B, n_h*n_w, E), pos (B, n_h*n_w, 2)."""
    B, C, H, W = x.shape
    p = patch_size
    assert H % p == 0 and W % p == 0, "image size must match patch grid"
    n_h, n_w = H // p, W // p

    # Non-overlapping patchify == Conv2d(kernel=stride=p): zero data duplication.
    # (B, C, H, W) -> (B, n_h, n_w, C, p, p) -> (B*n_h*n_w, C*p*p)
    xp = x.reshape(B, C, n_h, p, n_w, p).transpose(0, 2, 4, 1, 3, 5)
    patches = xp.reshape(B * n_h * n_w, C * p * p)

    tokens = patch_proj_matmul(patches, params["proj_w"], params["proj_b"])

    if flatten:
        # == proj(x).flatten(2).transpose(1, 2)
        tokens = tokens.reshape(B, n_h * n_w, -1)
    else:
        tokens = tokens.reshape(B, n_h, n_w, -1).transpose(0, 3, 1, 2)  # NCHW

    # norm_layer=None -> nn.Identity(), nothing to do.

    # PositionGetter: cartesian_prod(arange(n_h), arange(n_w)), expanded over batch.
    # Pure integer index bookkeeping (no FLOPs) -> built with jnp, not a kernel.
    yy, xx = jnp.meshgrid(jnp.arange(n_h, dtype=jnp.int32),
                          jnp.arange(n_w, dtype=jnp.int32), indexing="ij")
    pos = jnp.stack([yy.reshape(-1), xx.reshape(-1)], axis=-1)      # (n_h*n_w, 2)
    pos = jnp.broadcast_to(pos[None], (B, n_h * n_w, 2))

    return tokens, pos


# ----------------------------------------------------------------------------
# Main
# ----------------------------------------------------------------------------
if __name__ == "__main__":
    B, C = 2, 3
    H = W = 64
    PATCH = 16
    EMBED = 128  # lane-dense embedding dim (multiple of 128); torch default is 768

    key = jax.random.PRNGKey(0)
    k_param, k_x = jax.random.split(key)
    params = init_patch_embed_params(k_param, in_chans=C, embed_dim=EMBED,
                                     patch_size=PATCH)
    x = jax.random.normal(k_x, (B, C, H, W), dtype=jnp.float32)

    fwd = jax.jit(functools.partial(patch_embed_forward,
                                    patch_size=PATCH, flatten=True))
    tokens, pos = fwd(params, x)
    tokens, pos = jax.block_until_ready((tokens, pos))

    n_h, n_w = H // PATCH, W // PATCH
    assert tokens.shape == (B, n_h * n_w, EMBED), tokens.shape
    assert pos.shape == (B, n_h * n_w, 2), pos.shape
    assert bool(jnp.all(jnp.isfinite(tokens)))

    # Reference check against plain JAX at the same (bf16 MXU, f32 acc) precision.
    xp = x.reshape(B, C, n_h, PATCH, n_w, PATCH).transpose(0, 2, 4, 1, 3, 5)
    patches_ref = xp.reshape(B * n_h * n_w, C * PATCH * PATCH).astype(jnp.bfloat16)
    ref = (jnp.dot(patches_ref, params["proj_w"].astype(jnp.bfloat16),
                   preferred_element_type=jnp.float32)
           + params["proj_b"][None, :]).reshape(B, n_h * n_w, EMBED)
    assert bool(jnp.allclose(tokens, ref, rtol=2e-2, atol=2e-2)), (
        float(jnp.max(jnp.abs(tokens - ref))))

    exp_pos = jnp.stack(jnp.meshgrid(jnp.arange(n_h, dtype=jnp.int32),
                                     jnp.arange(n_w, dtype=jnp.int32),
                                     indexing="ij"), axis=-1).reshape(-1, 2)
    assert bool(jnp.all(pos[0] == exp_pos)) and bool(jnp.all(pos[1] == exp_pos))

    print("KERNEL_OK")
</pallas_src>

<mosaic_0001>
module attributes {stable_mosaic.version = 11 : i64} {
  func.func @_proj_kernel(%arg0: i32, %arg1: memref<16x768xbf16, #tpu.memory_space<vmem>>, %arg2: memref<768x128xbf16, #tpu.memory_space<vmem>>, %arg3: memref<1x128xf32, #tpu.memory_space<vmem>>, %arg4: memref<16x128xf32, #tpu.memory_space<vmem>>) attributes {dimension_semantics = [#tpu.dimension_semantics<parallel>], iteration_bounds = array<i64: 2>, scalar_prefetch = 0 : i64, scratch_operands = 0 : i64, tpu.core_type = #tpu.core_type<tc>, window_params = [{transform_indices = @transform_0, window_bounds = array<i64: 16, 768>}, {pipeline_mode = #tpu.pipeline_mode<synchronous>, transform_indices = @transform_1, window_bounds = array<i64: 768, 128>}, {pipeline_mode = #tpu.pipeline_mode<synchronous>, transform_indices = @transform_2, window_bounds = array<i64: 1, 128>}, {transform_indices = @transform_3, window_bounds = array<i64: 16, 128>}]} {
    %c0 = arith.constant 0 : index
    %c0_0 = arith.constant 0 : index
    %0 = vector.load %arg1[%c0, %c0_0] : memref<16x768xbf16, #tpu.memory_space<vmem>>, vector<16x768xbf16>
    %c0_1 = arith.constant 0 : index
    %c0_2 = arith.constant 0 : index
    %1 = vector.load %arg2[%c0_1, %c0_2] : memref<768x128xbf16, #tpu.memory_space<vmem>>, vector<768x128xbf16>
    %cst = arith.constant dense<0.000000e+00> : vector<16x128xf32>
    %2 = tpu.matmul %0, %1, %cst {dimension_numbers = #tpu.dot_dimension_numbers<[1], [0], [0], [1], [0, 0, 1, 1], [], []>} : vector<16x768xbf16>, vector<768x128xbf16>, vector<16x128xf32> -> vector<16x128xf32>
    %c0_3 = arith.constant 0 : index
    %c0_4 = arith.constant 0 : index
    %3 = vector.load %arg3[%c0_3, %c0_4] : memref<1x128xf32, #tpu.memory_space<vmem>>, vector<1x128xf32>
    %4 = vector.broadcast %3 : vector<1x128xf32> to vector<16x128xf32>
    %5 = arith.addf %2, %4 : vector<16x128xf32>
    %c0_5 = arith.constant 0 : index
    %c0_6 = arith.constant 0 : index
    %6 = vector.load %arg4[%c0_5, %c0_6] : memref<16x128xf32, #tpu.memory_space<vmem>>, vector<16x128xf32>
    tpu.vector_store %arg4[%c0_5, %c0_6], %5 {strides = array<i32>} : memref<16x128xf32, #tpu.memory_space<vmem>>, vector<16x128xf32>,
    return
  }
  func.func @transform_0(%arg0: i32) -> (i32, i32) {
    %c0_i32 = arith.constant 0 : i32
    %c0_i32_0 = arith.constant 0 : i32
    return %arg0, %c0_i32 : i32, i32
  }
  func.func @transform_1(%arg0: i32) -> (i32, i32) {
    %c0_i32 = arith.constant 0 : i32
    %c0_i32_0 = arith.constant 0 : i32
    %c0_i32_1 = arith.constant 0 : i32
    return %c0_i32, %c0_i32_0 : i32, i32
  }
  func.func @transform_2(%arg0: i32) -> (i32, i32) {
    %c0_i32 = arith.constant 0 : i32
    %c0_i32_0 = arith.constant 0 : i32
    %c0_i32_1 = arith.constant 0 : i32
    return %c0_i32, %c0_i32_0 : i32, i32
  }
  func.func @transform_3(%arg0: i32) -> (i32, i32) {
    %c0_i32 = arith.constant 0 : i32
    %c0_i32_0 = arith.constant 0 : i32
    return %arg0, %c0_i32 : i32, i32
  }
}

</mosaic_0001>

<llo_original>
// kernel: patch_embed_forward.1
$region0: #{patch_embed_forward.1}
  #allocation0 [shape = 'u32[]', space=smem, size = 0x4, offset = 0x4, fixed_abs, tag = 'smem constant byte address 0x4 - core index']
  #allocation1 [shape = 'u32[144,128]{1,0:T(1,128)}', space=vmem, size = 0x12000, scoped, tag = 'internal scratch']
  %s0 = inlined_call_operand.vmem [shape: bf16[32,768], index: 0, kind: input, shape index: {}]
  %s1 = inlined_call_operand.vmem [shape: bf16[768,128], index: 1, kind: input, shape index: {}]
  %s2 = inlined_call_operand.vmem [shape: f32[1,128], index: 2, kind: input, shape index: {}]
  %s3 = inlined_call_operand.hbm [shape: f32[32,128], index: 3, kind: output, shape index: {}]
  %s4 = sld [smem:[#allocation0]]
  $region45: #{patch_embed_forward.1} parent=0
    _
  %s6 = ssub.s32 1, %s4
  %s7 = scalar_select 0, %s6, %s4
  $region1: #{patch_embed_forward.1} parent=0
    #allocation2 [shape = 'u8[16384]{0}', space=vmem, size = 0x4000, scoped, tag = 'output window, operand 0']
    #allocation3 [shape = 's32[2]{0}', space=sflag, size = 0x8, scoped, tag = 'scoped memory for patch_embed_forward.1']
    %8 = vsyncpa [#allocation3], 0
    %s9 = scalar_lea.sflag [#allocation3], 1
    %10 = vsyncpa %s9, 0
    loop: start=0, step=1, limit=4
    $region2: #{patch_embed_forward.1} parent=1 // loop_pre_header
      _
    $region3: #{patch_embed_forward.1} parent=1 // loop_header
      %s12 = sphi 0, %s16
      %p13 = scmp.ge.s32.totalorder %s12, 4
      %s22 = sphi 0, %s24
      %s25 = sphi 0, %s22
      %s26 = sphi 0, %s25
      %s42 = sphi 0, %s26
      %s46 = sphi 0, %s46
      %s48 = sphi 0, %s46
      %s49 = sphi 0, %s48
      %s63 = sphi 0, %s49
      %s67 = sphi 0, %s67
      %s69 = sphi 0, %s67
      %s70 = sphi 0, %s69
      %s84 = sphi 0, %s70
      %s90 = sphi 0, %s92
      %s93 = sphi 0, %s90
      %s94 = sphi 0, %s93
      %s110 = sphi 0, %s94
    $region4: #{patch_embed_forward.1} parent=1 // loop_header_branch
      %15 = sbr.rel (%p13) target = $region8
    $region5: #{patch_embed_forward.1} parent=1 // loop_body
      %s17 = ssub.s32 %s12, 1
      %s18 = ssub.s32 %s12, 2
      %s19 = sadd.s32 %s12, 1
      %s20 = ssub.s32 %s12, %s19
      %p21 = scmp.eq.s32.totalorder %s20, 0
      %s23 = sadd.s32 %s22, 1
      %s24 = scalar_select %p21, %s22, %s23
      %p27 = pneg %p21
      %p28 = scmp.eq.s32.totalorder %s12, 1
      %p29 = por %p27, %p28
      %p30 = scmp.ne.s32.totalorder %s22, %s25
      %p31 = scmp.eq.s32.totalorder %s12, 0
      %p32 = por %p30, %p31
      %p33 = scmp.ne.s32.totalorder %s22, %s25
      %p34 = scmp.eq.s32.totalorder %s17, 1
      %p35 = por %p33, %p34
      %p36 = scmp.ne.s32.totalorder %s25, %s26
      %p37 = scmp.eq.s32.totalorder %s17, 0
      %p38 = por %p36, %p37
      %p39 = scmp.ne.s32.totalorder %s25, %s26
      %p40 = scmp.eq.s32.totalorder %s18, 1
      %p41 = por %p39, %p40
      %p43 = scmp.ne.s32.totalorder %s26, %s42
      %p44 = scmp.eq.s32.totalorder %s18, 0
      %p45 = por %p43, %p44
      %s47 = sadd.s32 %s46, 1
      %p50 = scmp.eq.s32.totalorder %s12, 1
      %p51 = scmp.ne.s32.totalorder %s46, %s48
      %p52 = scmp.eq.s32.totalorder %s12, 0
      %p53 = por %p51, %p52
      %p54 = scmp.ne.s32.totalorder %s46, %s48
      %p55 = scmp.eq.s32.totalorder %s17, 1
      %p56 = por %p54, %p55
      %p57 = scmp.ne.s32.totalorder %s48, %s49
      %p58 = scmp.eq.s32.totalorder %s17, 0
      %p59 = por %p57, %p58
      %p60 = scmp.ne.s32.totalorder %s48, %s49
      %p61 = scmp.eq.s32.totalorder %s18, 1
      %p62 = por %p60, %p61
      %p64 = scmp.ne.s32.totalorder %s49, %s63
      %p65 = scmp.eq.s32.totalorder %s18, 0
      %p66 = por %p64, %p65
      %s68 = sadd.s32 %s67, 1
      %p71 = scmp.eq.s32.totalorder %s12, 1
      %p72 = scmp.ne.s32.totalorder %s67, %s69
      %p73 = scmp.eq.s32.totalorder %s12, 0
      %p74 = por %p72, %p73
      %p75 = scmp.ne.s32.totalorder %s67, %s69
      %p76 = scmp.eq.s32.totalorder %s17, 1
      %p77 = por %p75, %p76
      %p78 = scmp.ne.s32.totalorder %s69, %s70
      %p79 = scmp.eq.s32.totalorder %s17, 0
      %p80 = por %p78, %p79
      %p81 = scmp.ne.s32.totalorder %s69, %s70
      %p82 = scmp.eq.s32.totalorder %s18, 1
      %p83 = por %p81, %p82
      %p85 = scmp.ne.s32.totalorder %s70, %s84
      %p86 = scmp.eq.s32.totalorder %s18, 0
      %p87 = por %p85, %p86
      %s88 = ssub.s32 %s12, %s19
      %p89 = scmp.eq.s32.totalorder %s88, 0
      %s91 = sadd.s32 %s90, 1
      %s92 = scalar_select %p89, %s90, %s91
      %p95 = pneg %p89
      %p96 = scmp.eq.s32.totalorder %s12, 1
      %p97 = por %p95, %p96
      %p98 = scmp.ne.s32.totalorder %s90, %s93
      %p99 = scmp.eq.s32.totalorder %s12, 0
      %p100 = por %p98, %p99
      %p101 = scmp.ne.s32.totalorder %s90, %s93
      %p102 = scmp.eq.s32.totalorder %s17, 1
      %p103 = por %p101, %p102
      %p104 = scmp.ne.s32.totalorder %s93, %s94
      %p105 = scmp.eq.s32.totalorder %s17, 0
      %p106 = por %p104, %p105
      %p107 = scmp.ne.s32.totalorder %s93, %s94
      %p108 = scmp.eq.s32.totalorder %s18, 1
      %p109 = por %p107, %p108
      %p111 = scmp.ne.s32.totalorder %s94, %s110
      %p112 = scmp.eq.s32.totalorder %s18, 0
      %p113 = por %p111, %p112
      %p114 = scmp.le.s32.totalorder 1, %s12
      %p115 = scmp.lt.s32.totalorder %s12, 3
      %p116 = pnand %p114, %p115
      %p117 = pneg %p116
      // Predicated region
      $region9: #{patch_embed_forward.1} parent=5 // pred_check
        _
      $region10: #{patch_embed_forward.1} parent=5 // pred_check_branch
        %119 = sbr.rel (%p116) target = $region12
      $region11: #{patch_embed_forward.1} parent=5 // pred_region
        %s120 = ssub.s32 %s12, 1
        // Predicated region
        $region13: #{patch_embed_forward.1} parent=11 // pred_check
          %p121 = pneg %p59
        $region14: #{patch_embed_forward.1} parent=11 // pred_check_branch
          %123 = sbr.rel (%p121) target = $region16
        $region15: #{patch_embed_forward.1} parent=11 // pred_region
          _
        $region16: #{patch_embed_forward.1} parent=11 // pred_fallthru
          _
        // Predicated region
        $region17: #{patch_embed_forward.1} parent=11 // pred_check
          %p124 = pneg %p80
        $region18: #{patch_embed_forward.1} parent=11 // pred_check_branch
          %126 = sbr.rel (%p124) target = $region20
        $region19: #{patch_embed_forward.1} parent=11 // pred_region
          _
        $region20: #{patch_embed_forward.1} parent=11 // pred_fallthru
          _
      $region12: #{patch_embed_forward.1} parent=5 // pred_fallthru
        _
      %p127 = scmp.lt.s32.totalorder %s12, 2
      // Predicated region
      $region21: #{patch_embed_forward.1} parent=5 // pred_check
        %p128 = pneg %p127
      $region22: #{patch_embed_forward.1} parent=5 // pred_check_branch
        %130 = sbr.rel (%p128) target = $region24
      $region23: #{patch_embed_forward.1} parent=5 // pred_region
        // Predicated region
        $region25: #{patch_embed_forward.1} parent=23 // pred_check
          %p131 = pneg %p32
        $region26: #{patch_embed_forward.1} parent=23 // pred_check_branch
          %133 = sbr.rel (%p131) target = $region28
        $region27: #{patch_embed_forward.1} parent=23 // pred_region
          %s134 = smul.u32 2, %s12
          %p135 = scmp.lt.s32.totalorder %s134, 3
          %s136 = scalar_select %p135, %s134, 3
          %s137 = smul.addr %s136, 6
          %s138 = smul.addr %s137, 4
          %s139 = scalar_lea.vmem %s0, %s138
          %s140 = smul.u32 2, %s12
        $region28: #{patch_embed_forward.1} parent=23 // pred_fallthru
          _
      $region24: #{patch_embed_forward.1} parent=5 // pred_fallthru
        _
      %p141 = scmp.le.s32.totalorder 1, %s12
      %p142 = scmp.lt.s32.totalorder %s12, 3
      %p143 = pnand %p141, %p142
      %p144 = pneg %p143
      // Predicated region
      $region29: #{patch_embed_forward.1} parent=5 // pred_check
        _
      $region30: #{patch_embed_forward.1} parent=5 // pred_check_branch
        %146 = sbr.rel (%p143) target = $region32
      $region31: #{patch_embed_forward.1} parent=5 // pred_region
        %s147 = ssub.s32 %s12, 1
        %s148 = smul.u32 2, %s17
        %p149 = scmp.lt.s32.totalorder %s148, 3
        %s150 = scalar_select %p149, %s148, 3
        %s151 = smul.addr %s150, 6
        %s152 = smul.addr %s151, 4
        %s153 = scalar_lea.vmem %s0, %s152
        %p154 = pneg %p38
        %p155 = pneg %p35
        %p156 = pneg %p59
        %p157 = pneg %p56
        %p158 = pneg %p80
        %p159 = pneg %p77
        %p160 = pneg %p106
        %p161 = pneg %p103
        %s162 = sand.u32 %s93, 1
        %s163 = scalar_lea.sflag [#allocation3], %s162
        %s164 = sand.u32 %s93, 1
        %s165 = smul.addr %s164, 16
        %s166 = scalar_lea.vmem [#allocation2], %s165
        %s167 = smul.u32 2, %s17
        %p168 = scmp.lt.s32.totalorder %s167, 3
        %s169 = scalar_select %p168, %s167, 3
        %s170 = smul.addr %s169, 6
        %s171 = smul.addr %s170, 4
        %s172 = scalar_lea.vmem %s0, %s171
        %s173 = smul.u32 2, %s17
        %s174 = smul.u32 2, %s17
        %v176 = vld [vmem:[%s172] sm:$0xff]
        %v177 = vld [vmem:[%s172 + $0x8] sm:$0xff]
        %v178 = vld [vmem:[%s172 + $0x10] sm:$0xff]
        %v179 = vld [vmem:[%s172 + $0x18] sm:$0xff]
        %v180 = vld [vmem:[%s172 + $0x20] sm:$0xff]
        %v181 = vld [vmem:[%s172 + $0x28] sm:$0xff]
        %v182 = vld [vmem:[%s1] sm:$0xf]
        %v183 = vld [vmem:[%s1 + $0x4] sm:$0xf]
        %v184 = vld [vmem:[%s1 + $0x8] sm:$0xf]
        %v185 = vld [vmem:[%s1 + $0xc] sm:$0xf]
        %v186 = vld [vmem:[%s1 + $0x10] sm:$0xf]
        %v187 = vld [vmem:[%s1 + $0x14] sm:$0xf]
        %v188 = vld [vmem:[%s1 + $0x18] sm:$0xf]
        %v189 = vld [vmem:[%s1 + $0x1c] sm:$0xf]
        %v190 = vld [vmem:[%s1 + $0x20] sm:$0xf]
        %v191 = vld [vmem:[%s1 + $0x24] sm:$0xf]
        %v192 = vld [vmem:[%s1 + $0x28] sm:$0xf]
        %v193 = vld [vmem:[%s1 + $0x2c] sm:$0xf]
        %v194 = vld [vmem:[%s1 + $0x30] sm:$0xf]
        %v195 = vld [vmem:[%s1 + $0x34] sm:$0xf]
        %v196 = vld [vmem:[%s1 + $0x38] sm:$0xf]
        %v197 = vld [vmem:[%s1 + $0x3c] sm:$0xf]
        %v198 = vld [vmem:[%s1 + $0x40] sm:$0xf]
        %v199 = vld [vmem:[%s1 + $0x44] sm:$0xf]
        %v200 = vld [vmem:[%s1 + $0x48] sm:$0xf]
        %v201 = vld [vmem:[%s1 + $0x4c] sm:$0xf]
        %v202 = vld [vmem:[%s1 + $0x50] sm:$0xf]
        %v203 = vld [vmem:[%s1 + $0x54] sm:$0xf]
        %v204 = vld [vmem:[%s1 + $0x58] sm:$0xf]
        %v205 = vld [vmem:[%s1 + $0x5c] sm:$0xf]
        %v206 = vld [vmem:[%s1 + $0x60] sm:$0xf]
        %v207 = vld [vmem:[%s1 + $0x64] sm:$0xf]
        %v208 = vld [vmem:[%s1 + $0x68] sm:$0xf]
        %v209 = vld [vmem:[%s1 + $0x6c] sm:$0xf]
        %v210 = vld [vmem:[%s1 + $0x70] sm:$0xf]
        %v211 = vld [vmem:[%s1 + $0x74] sm:$0xf]
        %v212 = vld [vmem:[%s1 + $0x78] sm:$0xf]
        %v213 = vld [vmem:[%s1 + $0x7c] sm:$0xf]
        %v214 = vld [vmem:[%s1 + $0x80] sm:$0xf]
        %v215 = vld [vmem:[%s1 + $0x84] sm:$0xf]
        %v216 = vld [vmem:[%s1 + $0x88] sm:$0xf]
        %v217 = vld [vmem:[%s1 + $0x8c] sm:$0xf]
        %v218 = vld [vmem:[%s1 + $0x90] sm:$0xf]
        %v219 = vld [vmem:[%s1 + $0x94] sm:$0xf]
        %v220 = vld [vmem:[%s1 + $0x98] sm:$0xf]
        %v221 = vld [vmem:[%s1 + $0x9c] sm:$0xf]
        %v222 = vld [vmem:[%s1 + $0xa0] sm:$0xf]
        %v223 = vld [vmem:[%s1 + $0xa4] sm:$0xf]
        %v224 = vld [vmem:[%s1 + $0xa8] sm:$0xf]
        %v225 = vld [vmem:[%s1 + $0xac] sm:$0xf]
        %v226 = vld [vmem:[%s1 + $0xb0] sm:$0xf]
        %v227 = vld [vmem:[%s1 + $0xb4] sm:$0xf]
        %v228 = vld [vmem:[%s1 + $0xb8] sm:$0xf]
        %v229 = vld [vmem:[%s1 + $0xbc] sm:$0xf]
        %v230 = vld [vmem:[%s1 + $0xc0] sm:$0xf]
        %v231 = vld [vmem:[%s1 + $0xc4] sm:$0xf]
        %v232 = vld [vmem:[%s1 + $0xc8] sm:$0xf]
        %v233 = vld [vmem:[%s1 + $0xcc] sm:$0xf]
        %v234 = vld [vmem:[%s1 + $0xd0] sm:$0xf]
        %v235 = vld [vmem:[%s1 + $0xd4] sm:$0xf]
        %v236 = vld [vmem:[%s1 + $0xd8] sm:$0xf]
        %v237 = vld [vmem:[%s1 + $0xdc] sm:$0xf]
        %v238 = vld [vmem:[%s1 + $0xe0] sm:$0xf]
        %v239 = vld [vmem:[%s1 + $0xe4] sm:$0xf]
        %v240 = vld [vmem:[%s1 + $0xe8] sm:$0xf]
        %v241 = vld [vmem:[%s1 + $0xec] sm:$0xf]
        %v242 = vld [vmem:[%s1 + $0xf0] sm:$0xf]
        %v243 = vld [vmem:[%s1 + $0xf4] sm:$0xf]
        %v244 = vld [vmem:[%s1 + $0xf8] sm:$0xf]
        %v245 = vld [vmem:[%s1 + $0xfc] sm:$0xf]
        %v246 = vld [vmem:[%s1 + $0x100] sm:$0xf]
        %v247 = vld [vmem:[%s1 + $0x104] sm:$0xf]
        %v248 = vld [vmem:[%s1 + $0x108] sm:$0xf]
        %v249 = vld [vmem:[%s1 + $0x10c] sm:$0xf]
        %v250 = vld [vmem:[%s1 + $0x110] sm:$0xf]
        %v251 = vld [vmem:[%s1 + $0x114] sm:$0xf]
        %v252 = vld [vmem:[%s1 + $0x118] sm:$0xf]
        %v253 = vld [vmem:[%s1 + $0x11c] sm:$0xf]
        %v254 = vld [vmem:[%s1 + $0x120] sm:$0xf]
        %v255 = vld [vmem:[%s1 + $0x124] sm:$0xf]
        %v256 = vld [vmem:[%s1 + $0x128] sm:$0xf]
        %v257 = vld [vmem:[%s1 + $0x12c] sm:$0xf]
        %v258 = vld [vmem:[%s1 + $0x130] sm:$0xf]
        %v259 = vld [vmem:[%s1 + $0x134] sm:$0xf]
        %v260 = vld [vmem:[%s1 + $0x138] sm:$0xf]
        %v261 = vld [vmem:[%s1 + $0x13c] sm:$0xf]
        %v262 = vld [vmem:[%s1 + $0x140] sm:$0xf]
        %v263 = vld [vmem:[%s1 + $0x144] sm:$0xf]
        %v264 = vld [vmem:[%s1 + $0x148] sm:$0xf]
        %v265 = vld [vmem:[%s1 + $0x14c] sm:$0xf]
        %v266 = vld [vmem:[%s1 + $0x150] sm:$0xf]
        %v267 = vld [vmem:[%s1 + $0x154] sm:$0xf]
        %v268 = vld [vmem:[%s1 + $0x158] sm:$0xf]
        %v269 = vld [vmem:[%s1 + $0x15c] sm:$0xf]
        %v270 = vld [vmem:[%s1 + $0x160] sm:$0xf]
        %v271 = vld [vmem:[%s1 + $0x164] sm:$0xf]
        %v272 = vld [vmem:[%s1 + $0x168] sm:$0xf]
        %v273 = vld [vmem:[%s1 + $0x16c] sm:$0xf]
        %v274 = vld [vmem:[%s1 + $0x170] sm:$0xf]
        %v275 = vld [vmem:[%s1 + $0x174] sm:$0xf]
        %v276 = vld [vmem:[%s1 + $0x178] sm:$0xf]
        %v277 = vld [vmem:[%s1 + $0x17c] sm:$0xf]
        %v278 = vld [vmem:[%s2] sm:$0x1]
        %v280 = vlaneseq
        %v281 = vshrl.u32 %v280, 7
        %v282 = vsub.s32 0, %v281
        %v283 = vrot.slane %v278, %v282
        %v291 = vunpack.c.l.b16 %v176
        %v292 = vunpack.c.h.b16 %v176
        %v293 = vunpack.c.l.b16 %v177
        %v294 = vunpack.c.h.b16 %v177
        %v295 = vunpack.c.l.b16 %v178
        %v296 = vunpack.c.h.b16 %v178
        %v297 = vunpack.c.l.b16 %v179
        %v298 = vunpack.c.h.b16 %v179
        %v299 = vunpack.c.l.b16 %v180
        %v300 = vunpack.c.h.b16 %v180
        %v301 = vunpack.c.l.b16 %v181
        %v302 = vunpack.c.h.b16 %v181
        %v303 = vpack.c.b16 %v297, %v291
        %v304 = vpack.c.b16 %v298, %v292
        %v305 = vpack.c.b16 %v299, %v293
        %v306 = vpack.c.b16 %v300, %v294
        %v307 = vpack.c.b16 %v301, %v295
        %v308 = vpack.c.b16 %v302, %v296
        %v411 = vunpack.c.l.b16 %v182
        %v412 = vunpack.c.l.b16 %v183
        %v413 = vunpack.c.l.b16 %v184
        %v414 = vunpack.c.l.b16 %v185
        %v415 = vunpack.c.l.b16 %v186
        %v416 = vunpack.c.l.b16 %v187
        %v417 = vunpack.c.l.b16 %v188
        %v418 = vunpack.c.l.b16 %v189
        %v419 = vunpack.c.l.b16 %v190
        %v420 = vunpack.c.l.b16 %v191
        %v421 = vunpack.c.l.b16 %v192
        %v422 = vunpack.c.l.b16 %v193
        %v423 = vunpack.c.l.b16 %v194
        %v424 = vunpack.c.l.b16 %v195
        %v425 = vunpack.c.l.b16 %v196
        %v426 = vunpack.c.l.b16 %v197
        %v427 = vunpack.c.l.b16 %v198
        %v428 = vunpack.c.l.b16 %v199
        %v429 = vunpack.c.l.b16 %v200
        %v430 = vunpack.c.l.b16 %v201
        %v431 = vunpack.c.l.b16 %v202
        %v432 = vunpack.c.l.b16 %v203
        %v433 = vunpack.c.l.b16 %v204
        %v434 = vunpack.c.l.b16 %v205
        %v435 = vunpack.c.l.b16 %v206
        %v436 = vunpack.c.l.b16 %v207
        %v437 = vunpack.c.l.b16 %v208
        %v438 = vunpack.c.l.b16 %v209
        %v439 = vunpack.c.l.b16 %v210
        %v440 = vunpack.c.l.b16 %v211
        %v441 = vunpack.c.l.b16 %v212
        %v442 = vunpack.c.l.b16 %v213
        %v443 = vunpack.c.l.b16 %v214
        %v444 = vunpack.c.l.b16 %v215
        %v445 = vunpack.c.l.b16 %v216
        %v446 = vunpack.c.l.b16 %v217
        %v447 = vunpack.c.l.b16 %v218
        %v448 = vunpack.c.l.b16 %v219
        %v449 = vunpack.c.l.b16 %v220
        %v450 = vunpack.c.l.b16 %v221
        %v451 = vunpack.c.l.b16 %v222
        %v452 = vunpack.c.l.b16 %v223
        %v453 = vunpack.c.l.b16 %v224
        %v454 = vunpack.c.l.b16 %v225
        %v455 = vunpack.c.l.b16 %v226
        %v456 = vunpack.c.l.b16 %v227
        %v457 = vunpack.c.l.b16 %v228
        %v458 = vunpack.c.l.b16 %v229
        %v459 = vunpack.c.l.b16 %v230
        %v460 = vunpack.c.l.b16 %v231
        %v461 = vunpack.c.l.b16 %v232
        %v462 = vunpack.c.l.b16 %v233
        %v463 = vunpack.c.l.b16 %v234
        %v464 = vunpack.c.l.b16 %v235
        %v465 = vunpack.c.l.b16 %v236
        %v466 = vunpack.c.l.b16 %v237
        %v467 = vunpack.c.l.b16 %v238
        %v468 = vunpack.c.l.b16 %v239
        %v469 = vunpack.c.l.b16 %v240
        %v470 = vunpack.c.l.b16 %v241
        %v471 = vunpack.c.l.b16 %v242
        %v472 = vunpack.c.l.b16 %v243
        %v473 = vunpack.c.l.b16 %v244
        %v474 = vunpack.c.l.b16 %v245
        %v475 = vunpack.c.l.b16 %v246
        %v476 = vunpack.c.l.b16 %v247
        %v477 = vunpack.c.l.b16 %v248
        %v478 = vunpack.c.l.b16 %v249
        %v479 = vunpack.c.l.b16 %v250
        %v480 = vunpack.c.l.b16 %v251
        %v481 = vunpack.c.l.b16 %v252
        %v482 = vunpack.c.l.b16 %v253
        %v483 = vunpack.c.l.b16 %v254
        %v484 = vunpack.c.l.b16 %v255
        %v485 = vunpack.c.l.b16 %v256
        %v486 = vunpack.c.l.b16 %v257
        %v487 = vunpack.c.l.b16 %v258
        %v488 = vunpack.c.l.b16 %v259
        %v489 = vunpack.c.l.b16 %v260
        %v490 = vunpack.c.l.b16 %v261
        %v491 = vunpack.c.l.b16 %v262
        %v492 = vunpack.c.l.b16 %v263
        %v493 = vunpack.c.l.b16 %v264
        %v494 = vunpack.c.l.b16 %v265
        %v495 = vunpack.c.l.b16 %v266
        %v496 = vunpack.c.l.b16 %v267
        %v497 = vunpack.c.l.b16 %v268
        %v498 = vunpack.c.l.b16 %v269
        %v499 = vunpack.c.l.b16 %v270
        %v500 = vunpack.c.l.b16 %v271
        %v501 = vunpack.c.l.b16 %v272
        %v502 = vunpack.c.l.b16 %v273
        %v503 = vunpack.c.l.b16 %v274
        %v504 = vunpack.c.l.b16 %v275
        %v505 = vunpack.c.l.b16 %v276
        %v506 = vunpack.c.l.b16 %v277
        %v507 = vpack.c.b16 %v412, %v411
        %v508 = vpack.c.b16 %v414, %v413
        %v509 = vpack.c.b16 %v416, %v415
        %v510 = vpack.c.b16 %v418, %v417
        %v511 = vpack.c.b16 %v420, %v419
        %v512 = vpack.c.b16 %v422, %v421
        %v513 = vpack.c.b16 %v424, %v423
        %v514 = vpack.c.b16 %v426, %v425
        %v515 = vpack.c.b16 %v428, %v427
        %v516 = vpack.c.b16 %v430, %v429
        %v517 = vpack.c.b16 %v432, %v431
        %v518 = vpack.c.b16 %v434, %v433
        %v519 = vpack.c.b16 %v436, %v435
        %v520 = vpack.c.b16 %v438, %v437
        %v521 = vpack.c.b16 %v440, %v439
        %v522 = vpack.c.b16 %v442, %v441
        %v523 = vpack.c.b16 %v444, %v443
        %v524 = vpack.c.b16 %v446, %v445
        %v525 = vpack.c.b16 %v448, %v447
        %v526 = vpack.c.b16 %v450, %v449
        %v527 = vpack.c.b16 %v452, %v451
        %v528 = vpack.c.b16 %v454, %v453
        %v529 = vpack.c.b16 %v456, %v455
        %v530 = vpack.c.b16 %v458, %v457
        %v531 = vpack.c.b16 %v460, %v459
        %v532 = vpack.c.b16 %v462, %v461
        %v533 = vpack.c.b16 %v464, %v463
        %v534 = vpack.c.b16 %v466, %v465
        %v535 = vpack.c.b16 %v468, %v467
        %v536 = vpack.c.b16 %v470, %v469
        %v537 = vpack.c.b16 %v472, %v471
        %v538 = vpack.c.b16 %v474, %v473
        %v539 = vpack.c.b16 %v476, %v475
        %v540 = vpack.c.b16 %v478, %v477
        %v541 = vpack.c.b16 %v480, %v479
        %v542 = vpack.c.b16 %v482, %v481
        %v543 = vpack.c.b16 %v484, %v483
        %v544 = vpack.c.b16 %v486, %v485
        %v545 = vpack.c.b16 %v488, %v487
        %v546 = vpack.c.b16 %v490, %v489
        %v547 = vpack.c.b16 %v492, %v491
        %v548 = vpack.c.b16 %v494, %v493
        %v549 = vpack.c.b16 %v496, %v495
        %v550 = vpack.c.b16 %v498, %v497
        %v551 = vpack.c.b16 %v500, %v499
        %v552 = vpack.c.b16 %v502, %v501
        %v553 = vpack.c.b16 %v504, %v503
        %v554 = vpack.c.b16 %v506, %v505
        %603 = vmatprep.subr.bf16.mxu0 0
        %604 = vmatpush1.bf16.msra.mxu0 %v507
        %605 = vmatprep.subr.bf16.mxu0 0
        %606 = vmatpush1.bf16.msra.mxu0 %v508
        %607 = vmatprep.subr.bf16.mxu0 0
        %608 = vmatpush1.bf16.msra.mxu0 %v509
        %609 = vmatprep.subr.bf16.mxu0 0
        %610 = vmatpush1.bf16.msra.mxu0 %v510
        %611 = vmatprep.subr.bf16.mxu0 0
        %612 = vmatpush1.bf16.msra.mxu0 %v511
        %613 = vmatprep.subr.bf16.mxu0 0
        %614 = vmatpush1.bf16.msra.mxu0 %v512
        %615 = vmatprep.subr.bf16.mxu0 0
        %616 = vmatpush1.bf16.msra.mxu0 %v513
        %617 = vmatprep.subr.bf16.mxu0 0
        %618 = vmatpush1.bf16.msra.mxu0 %v514
        %619 = vmatprep.subr.bf16.mxu0 0
        %620 = vmatpush1.bf16.msra.mxu0 %v515
        %621 = vmatprep.subr.bf16.mxu0 0
        %622 = vmatpush1.bf16.msra.mxu0 %v516
        %623 = vmatprep.subr.bf16.mxu0 0
        %624 = vmatpush1.bf16.msra.mxu0 %v517
        %625 = vmatprep.subr.bf16.mxu0 0
        %626 = vmatpush1.bf16.msra.mxu0 %v518
        %627 = vmatprep.subr.bf16.mxu0 0
        %628 = vmatpush1.bf16.msra.mxu0 %v519
        %629 = vmatprep.subr.bf16.mxu0 0
        %630 = vmatpush1.bf16.msra.mxu0 %v520
        %631 = vmatprep.subr.bf16.mxu0 0
        %632 = vmatpush1.bf16.msra.mxu0 %v521
        %633 = vmatprep.subr.bf16.mxu0 0
        %634 = vmatpush1.bf16.msra.mxu0 %v522
        %635 = vmatprep.mubr.bf16.mxu0 %v304
        %636 = vmatmul.mubr.bf16.gmra.mrb[0].mxu0 %v303
        %v637 = vpop.f32.mrb[0].mxu0
        %v638 = vadd.f32 %v283, %v637
        %v639 = vpop.f32.mrb[0].mxu0
        %v640 = vpop.f32.mrb[0].mxu0
        %v641 = vadd.f32 %v283, %v640
        %v642 = vpop.f32.mrb[0].mxu0
        %643 = vdwg.mxu0
        %644 = vmatprep.subr.bf16.mxu0 0
        %645 = vmatpush1.bf16.msra.mxu0 %v523
        %646 = vmatprep.subr.bf16.mxu0 0
        %647 = vmatpush1.bf16.msra.mxu0 %v524
        %648 = vmatprep.subr.bf16.mxu0 0
        %649 = vmatpush1.bf16.msra.mxu0 %v525
        %650 = vmatprep.subr.bf16.mxu0 0
        %651 = vmatpush1.bf16.msra.mxu0 %v526
        %652 = vmatprep.subr.bf16.mxu0 0
        %653 = vmatpush1.bf16.msra.mxu0 %v527
        %654 = vmatprep.subr.bf16.mxu0 0
        %655 = vmatpush1.bf16.msra.mxu0 %v528
        %656 = vmatprep.subr.bf16.mxu0 0
        %657 = vmatpush1.bf16.msra.mxu0 %v529
        %658 = vmatprep.subr.bf16.mxu0 0
        %659 = vmatpush1.bf16.msra.mxu0 %v530
        %660 = vmatprep.subr.bf16.mxu0 0
        %661 = vmatpush1.bf16.msra.mxu0 %v531
        %662 = vmatprep.subr.bf16.mxu0 0
        %663 = vmatpush1.bf16.msra.mxu0 %v532
        %664 = vmatprep.subr.bf16.mxu0 0
        %665 = vmatpush1.bf16.msra.mxu0 %v533
        %666 = vmatprep.subr.bf16.mxu0 0
        %667 = vmatpush1.bf16.msra.mxu0 %v534
        %668 = vmatprep.subr.bf16.mxu0 0
        %669 = vmatpush1.bf16.msra.mxu0 %v535
        %670 = vmatprep.subr.bf16.mxu0 0
        %671 = vmatpush1.bf16.msra.mxu0 %v536
        %672 = vmatprep.subr.bf16.mxu0 0
        %673 = vmatpush1.bf16.msra.mxu0 %v537
        %674 = vmatprep.subr.bf16.mxu0 0
        %675 = vmatpush1.bf16.msra.mxu0 %v538
        %676 = vmatprep.mubr.bf16.mxu0 %v306
        %677 = vmatmul.mubr.bf16.gmra.mrb[0].mxu0 %v305
        %v678 = vpop.f32.mrb[0].mxu0
        %v679 = vadd.f32 %v638, %v678
        %v680 = vpop.f32.mrb[0].mxu0
        %v681 = vpop.f32.mrb[0].mxu0
        %v682 = vadd.f32 %v641, %v681
        %v683 = vpop.f32.mrb[0].mxu0
        %684 = vdwg.mxu0
        %685 = vmatprep.subr.bf16.mxu0 0
        %686 = vmatpush1.bf16.msra.mxu0 %v539
        %687 = vmatprep.subr.bf16.mxu0 0
        %688 = vmatpush1.bf16.msra.mxu0 %v540
        %689 = vmatprep.subr.bf16.mxu0 0
        %690 = vmatpush1.bf16.msra.mxu0 %v541
        %691 = vmatprep.subr.bf16.mxu0 0
        %692 = vmatpush1.bf16.msra.mxu0 %v542
        %693 = vmatprep.subr.bf16.mxu0 0
        %694 = vmatpush1.bf16.msra.mxu0 %v543
        %695 = vmatprep.subr.bf16.mxu0 0
        %696 = vmatpush1.bf16.msra.mxu0 %v544
        %697 = vmatprep.subr.bf16.mxu0 0
        %698 = vmatpush1.bf16.msra.mxu0 %v545
        %699 = vmatprep.subr.bf16.mxu0 0
        %700 = vmatpush1.bf16.msra.mxu0 %v546
        %701 = vmatprep.subr.bf16.mxu0 0
        %702 = vmatpush1.bf16.msra.mxu0 %v547
        %703 = vmatprep.subr.bf16.mxu0 0
        %704 = vmatpush1.bf16.msra.mxu0 %v548
        %705 = vmatprep.subr.bf16.mxu0 0
        %706 = vmatpush1.bf16.msra.mxu0 %v549
        %707 = vmatprep.subr.bf16.mxu0 0
        %708 = vmatpush1.bf16.msra.mxu0 %v550
        %709 = vmatprep.subr.bf16.mxu0 0
        %710 = vmatpush1.bf16.msra.mxu0 %v551
        %711 = vmatprep.subr.bf16.mxu0 0
        %712 = vmatpush1.bf16.msra.mxu0 %v552
        %713 = vmatprep.subr.bf16.mxu0 0
        %714 = vmatpush1.bf16.msra.mxu0 %v553
        %715 = vmatprep.subr.bf16.mxu0 0
        %716 = vmatpush1.bf16.msra.mxu0 %v554
        %717 = vmatprep.mubr.bf16.mxu0 %v308
        %718 = vmatmul.mubr.bf16.gmra.mrb[0].mxu0 %v307
        %v719 = vpop.f32.mrb[0].mxu0
        %v720 = vadd.f32 %v679, %v719
        %v721 = vpop.f32.mrb[0].mxu0
        %v722 = vpop.f32.mrb[0].mxu0
        %v723 = vadd.f32 %v682, %v722
        %v724 = vpop.f32.mrb[0].mxu0
        %725 = vdwg.mxu0
        %726 = vst [vmem:[%s166] sm:$0xff] %v720
        %727 = vst [vmem:[%s166 + $0x8] sm:$0xff] %v723
        %s728 = sand.u32 %s93, 1
        %s729 = scalar_lea.sflag [#allocation3], %s728
        %s730 = sand.u32 %s93, 1
        %s731 = smul.addr %s730, 16
        %s732 = scalar_lea.vmem [#allocation2], %s731
        // Predicated region
        $region33: #{patch_embed_forward.1} parent=31 // pred_check
          %p733 = pneg %p103
        $region34: #{patch_embed_forward.1} parent=31 // pred_check_branch
          %735 = sbr.rel (%p733) target = $region36
        $region35: #{patch_embed_forward.1} parent=31 // pred_region
          %s736 = smul.u32 2, %s17
          %s738 = ssub.s32 256, 256
          %739 = vsyncadd %s729, %s738
          %s740 = smul.addr %s736, 128
          %s741 = scalar_lea.hbm %s3, %s740
          %s742 = sshll.u32 %s732, 4
          %s743 = int_to_ptr.vmem [resolvable:$true] %s742
          %748 = dma.vmem_to_hbm [thread:$0]  %s743, 256, %s741, %s729, 128, 128, 8
        $region36: #{patch_embed_forward.1} parent=31 // pred_fallthru
          _
      $region32: #{patch_embed_forward.1} parent=5 // pred_fallthru
        _
      %p749 = scmp.le.s32.totalorder 2, %s12
      // Predicated region
      $region37: #{patch_embed_forward.1} parent=5 // pred_check
        %p750 = pneg %p749
      $region38: #{patch_embed_forward.1} parent=5 // pred_check_branch
        %752 = sbr.rel (%p750) target = $region40
      $region39: #{patch_embed_forward.1} parent=5 // pred_region
        %s753 = ssub.s32 %s12, 2
        // Predicated region
        $region41: #{patch_embed_forward.1} parent=39 // pred_check
          %p754 = pneg %p109
        $region42: #{patch_embed_forward.1} parent=39 // pred_check_branch
          %756 = sbr.rel (%p754) target = $region44
        $region43: #{patch_embed_forward.1} parent=39 // pred_region
          %s757 = sand.u32 %s94, 1
          %s758 = scalar_lea.sflag [#allocation3], %s757
          %s759 = sand.u32 %s94, 1
          %s760 = smul.addr %s759, 16
          %s761 = scalar_lea.vmem [#allocation2], %s760
          %762 = dma.done %s758, 256
        $region44: #{patch_embed_forward.1} parent=39 // pred_fallthru
          _
      $region40: #{patch_embed_forward.1} parent=5 // pred_fallthru
        _
    $region6: #{patch_embed_forward.1} parent=1 // loop_footer
      %s16 = sadd.s32 1, %s12
    $region7: #{patch_embed_forward.1} parent=1 // loop_footer_branch
      %11 = sbr.rel target = $region3
    $region8: #{patch_embed_forward.1} parent=1 // loop_exit
      _
    %763 = vsyncpa [#allocation3], 1
    %s764 = scalar_lea.sflag [#allocation3], 1
    %765 = vsyncpa %s764, 1

</llo_original>
